<compile_context>
chip_gen: v5e
topology: v5e:2x2
jax: 0.10.0
libtpu: 0.0.40
codegen_flags: <defaults>
</compile_context>

<pallas_src>
import jax
import jax.numpy as jnp
from jax.experimental import pallas as pl
from jax.experimental.pallas import tpu as pltpu


# --------------------------------- kernels ----------------------------------

def _noisy_kernel(x_ref, wmu_ref, wsig_ref, eps_in_ref, eps_out_ref, b_ref,
                  o_ref, acc_ref):
    """Training-mode: y = x @ Wmu^T + ((x*eps_in) @ Wsig^T) * eps_out + bias."""
    k = pl.program_id(2)

    @pl.when(k == 0)
    def _():
        acc_ref[...] = jnp.zeros_like(acc_ref)

    x = x_ref[...]                                                # [tm, tk]
    # mu path (MXU)
    acc = jnp.dot(x, wmu_ref[...], preferred_element_type=jnp.float32)
    # sigma path via the factored-noise identity (no [OUT, IN] epsilon tensor)
    xs = x * eps_in_ref[...]                                      # [tm, tk]
    acc += jnp.dot(xs, wsig_ref[...],
                   preferred_element_type=jnp.float32) * eps_out_ref[...]
    acc_ref[...] += acc

    @pl.when(k == pl.num_programs(2) - 1)
    def _():
        o_ref[...] = (acc_ref[...] + b_ref[...]).astype(o_ref.dtype)


def _plain_kernel(x_ref, w_ref, b_ref, o_ref, acc_ref):
    """Eval-mode fast path: y = x @ Wmu^T + bias_mu."""
    k = pl.program_id(2)

    @pl.when(k == 0)
    def _():
        acc_ref[...] = jnp.zeros_like(acc_ref)

    acc_ref[...] += jnp.dot(x_ref[...], w_ref[...],
                            preferred_element_type=jnp.float32)

    @pl.when(k == pl.num_programs(2) - 1)
    def _():
        o_ref[...] = (acc_ref[...] + b_ref[...]).astype(o_ref.dtype)


# --------------------------------- wrapper ----------------------------------

def _pick_tile(dim, candidates):
    """Largest candidate that evenly divides `dim`; else the full dim."""
    for t in candidates:
        if t <= dim and dim % t == 0:
            return t
    return dim


def noisy_linear(x, weight_mu, weight_sigma, eps_in, eps_out,
                 bias_mu, bias_sigma, *, training=True,
                 tn_target=256, tk_target=256):
    """Pallas forward of NoisyLinear.

    x: [B, IN], weight_*: [OUT, IN] (PyTorch layout), eps_in: [IN],
    eps_out: [OUT] (bias epsilon == eps_out, as in the module). Returns [B, OUT].
    """
    B, IN = x.shape
    OUT = weight_mu.shape[0]

    # Transpose weights once (outside the kernel) -> standard [K, N] MXU RHS,
    # lane-dense OUT axis for the output store.
    wmu_t = weight_mu.T                                           # [IN, OUT]

    # Tile sizes: keep (2 weight streams x 2 buffers x tile bytes) << 32 MiB
    # so the same config works on v7x's smaller VMEM.
    tm = _pick_tile(B, (256, 128, 64, 32, 16, 8))
    tn = _pick_tile(OUT, (tn_target, 256, 128))
    tk = _pick_tile(IN, (tk_target, 256, 128))
    grid = (B // tm, OUT // tn, IN // tk)

    x_spec = pl.BlockSpec((tm, tk), lambda i, j, k: (i, k))
    w_spec = pl.BlockSpec((tk, tn), lambda i, j, k: (k, j))
    nvec_spec = pl.BlockSpec((1, tn), lambda i, j, k: (0, j))
    kvec_spec = pl.BlockSpec((1, tk), lambda i, j, k: (0, k))
    o_spec = pl.BlockSpec((tm, tn), lambda i, j, k: (i, j))

    cparams = pltpu.CompilerParams(
        dimension_semantics=("parallel", "parallel", "arbitrary"))

    if training:
        wsig_t = weight_sigma.T                                   # [IN, OUT]
        bias = (bias_mu + bias_sigma * eps_out).reshape(1, OUT)   # O(OUT) combine
        eps_in2 = eps_in.reshape(1, IN)
        eps_out2 = eps_out.reshape(1, OUT)
        cost = pl.CostEstimate(
            flops=4 * B * IN * OUT,
            transcendentals=0,
            bytes_accessed=4 * (2 * IN * OUT + 2 * B * IN + B * OUT
                                + IN + 2 * OUT))
        return pl.pallas_call(
            _noisy_kernel,
            out_shape=jax.ShapeDtypeStruct((B, OUT), x.dtype),
            grid=grid,
            in_specs=[x_spec, w_spec, w_spec, kvec_spec, nvec_spec, nvec_spec],
            out_specs=o_spec,
            scratch_shapes=[pltpu.VMEM((tm, tn), jnp.float32)],
            compiler_params=cparams,
            cost_estimate=cost,
        )(x, wmu_t, wsig_t, eps_in2, eps_out2, bias)

    # Eval fast path: only mu weights + mu bias are streamed.
    bias = bias_mu.reshape(1, OUT)
    cost = pl.CostEstimate(
        flops=2 * B * IN * OUT,
        transcendentals=0,
        bytes_accessed=4 * (IN * OUT + B * IN + B * OUT + OUT))
    return pl.pallas_call(
        _plain_kernel,
        out_shape=jax.ShapeDtypeStruct((B, OUT), x.dtype),
        grid=grid,
        in_specs=[x_spec, w_spec, nvec_spec],
        out_specs=o_spec,
        scratch_shapes=[pltpu.VMEM((tm, tn), jnp.float32)],
        compiler_params=cparams,
        cost_estimate=cost,
    )(x, wmu_t, bias)


# ----------------------- deterministic parameter setup -----------------------

def scale_noise(key, size):
    # torch: x.sign() * x.abs().sqrt()
    x = jax.random.normal(key, (size,), dtype=jnp.float32)
    return jnp.sign(x) * jnp.sqrt(jnp.abs(x))


def init_noisy_linear(key, in_features, out_features, std_init=0.5):
    k_wmu, k_bmu, k_ein, k_eout = jax.random.split(key, 4)
    mu_range = 1.0 / (in_features ** 0.5)
    weight_mu = jax.random.uniform(
        k_wmu, (out_features, in_features), jnp.float32, -mu_range, mu_range)
    weight_sigma = jnp.full((out_features, in_features),
                            std_init / in_features ** 0.5, jnp.float32)
    bias_mu = jax.random.uniform(
        k_bmu, (out_features,), jnp.float32, -mu_range, mu_range)
    bias_sigma = jnp.full((out_features,),
                          std_init / out_features ** 0.5, jnp.float32)
    eps_in = scale_noise(k_ein, in_features)      # factored noise: eps vectors
    eps_out = scale_noise(k_eout, out_features)   # (weight_eps = eps_out ⊗ eps_in)
    return weight_mu, weight_sigma, bias_mu, bias_sigma, eps_in, eps_out


if __name__ == "__main__":
    # Small shapes; grid = (1, 3, 2) exercises K accumulation and multiple N tiles.
    B, IN, OUT = 8, 512, 384

    key = jax.random.PRNGKey(0)
    k_params, k_x = jax.random.split(key)
    wmu, wsig, bmu, bsig, eps_in, eps_out = init_noisy_linear(k_params, IN, OUT)
    x = jax.random.normal(k_x, (B, IN), dtype=jnp.float32)

    out_train = noisy_linear(x, wmu, wsig, eps_in, eps_out, bmu, bsig,
                             training=True)
    out_eval = noisy_linear(x, wmu, wsig, eps_in, eps_out, bmu, bsig,
                            training=False)
    out_train, out_eval = jax.block_until_ready((out_train, out_eval))

    # Pure-JAX references (PyTorch NoisyLinear semantics).
    weps = jnp.outer(eps_out, eps_in)             # epsilon_out.ger(epsilon_in)
    ref_train = x @ (wmu + wsig * weps).T + (bmu + bsig * eps_out)
    ref_eval = x @ wmu.T + bmu

    assert out_train.shape == (B, OUT)
    assert out_eval.shape == (B, OUT)
    assert jnp.allclose(out_train, ref_train, atol=2e-4, rtol=2e-4)
    assert jnp.allclose(out_eval, ref_eval, atol=2e-4, rtol=2e-4)

    print("KERNEL_OK")
</pallas_src>

<mosaic_0001>
module attributes {stable_mosaic.version = 11 : i64} {
  func.func @_noisy_kernel(%arg0: i32, %arg1: i32, %arg2: i32, %arg3: memref<8x256xf32, #tpu.memory_space<vmem>>, %arg4: memref<256x128xf32, #tpu.memory_space<vmem>>, %arg5: memref<256x128xf32, #tpu.memory_space<vmem>>, %arg6: memref<1x256xf32, #tpu.memory_space<vmem>>, %arg7: memref<1x128xf32, #tpu.memory_space<vmem>>, %arg8: memref<1x128xf32, #tpu.memory_space<vmem>>, %arg9: memref<8x128xf32, #tpu.memory_space<vmem>>, %arg10: memref<8x128xf32, #tpu.memory_space<vmem>>) attributes {dimension_semantics = [#tpu.dimension_semantics<parallel>, #tpu.dimension_semantics<parallel>, #tpu.dimension_semantics<arbitrary>], iteration_bounds = array<i64: 1, 3, 2>, scalar_prefetch = 0 : i64, scratch_operands = 1 : i64, tpu.core_type = #tpu.core_type<tc>, window_params = [{transform_indices = @transform_0, window_bounds = array<i64: 8, 256>}, {transform_indices = @transform_1, window_bounds = array<i64: 256, 128>}, {transform_indices = @transform_2, window_bounds = array<i64: 256, 128>}, {transform_indices = @transform_3, window_bounds = array<i64: 1, 256>}, {transform_indices = @transform_4, window_bounds = array<i64: 1, 128>}, {transform_indices = @transform_5, window_bounds = array<i64: 1, 128>}, {transform_indices = @transform_6, window_bounds = array<i64: 8, 128>}]} {
    %c0_i32 = arith.constant 0 : i32
    %0 = arith.cmpi eq, %arg2, %c0_i32 : i32
    %1 = arith.extui %0 : i1 to i32
    %c0_i32_0 = arith.constant 0 : i32
    %2 = arith.cmpi ne, %1, %c0_i32_0 : i32
    scf.if %2 {
      %cst_16 = arith.constant 0.000000e+00 : f32
      %21 = vector.broadcast %cst_16 : f32 to vector<8x128xf32>
      %c0_17 = arith.constant 0 : index
      %c0_18 = arith.constant 0 : index
      %22 = vector.load %arg10[%c0_17, %c0_18] : memref<8x128xf32, #tpu.memory_space<vmem>>, vector<8x128xf32>
      tpu.vector_store %arg10[%c0_17, %c0_18], %21 {strides = array<i32>} : memref<8x128xf32, #tpu.memory_space<vmem>>, vector<8x128xf32>,
    } else {
    }
    %c0 = arith.constant 0 : index
    %c0_1 = arith.constant 0 : index
    %3 = vector.load %arg3[%c0, %c0_1] : memref<8x256xf32, #tpu.memory_space<vmem>>, vector<8x256xf32>
    %c0_2 = arith.constant 0 : index
    %c0_3 = arith.constant 0 : index
    %4 = vector.load %arg4[%c0_2, %c0_3] : memref<256x128xf32, #tpu.memory_space<vmem>>, vector<256x128xf32>
    %cst = arith.constant dense<0.000000e+00> : vector<8x128xf32>
    %5 = tpu.matmul %3, %4, %cst {dimension_numbers = #tpu.dot_dimension_numbers<[1], [0], [0], [1], [0, 0, 1, 1], [], []>} : vector<8x256xf32>, vector<256x128xf32>, vector<8x128xf32> -> vector<8x128xf32>
    %c0_4 = arith.constant 0 : index
    %c0_5 = arith.constant 0 : index
    %6 = vector.load %arg6[%c0_4, %c0_5] : memref<1x256xf32, #tpu.memory_space<vmem>>, vector<1x256xf32>
    %7 = vector.broadcast %6 : vector<1x256xf32> to vector<8x256xf32>
    %8 = arith.mulf %3, %7 : vector<8x256xf32>
    %c0_6 = arith.constant 0 : index
    %c0_7 = arith.constant 0 : index
    %9 = vector.load %arg5[%c0_6, %c0_7] : memref<256x128xf32, #tpu.memory_space<vmem>>, vector<256x128xf32>
    %cst_8 = arith.constant dense<0.000000e+00> : vector<8x128xf32>
    %10 = tpu.matmul %8, %9, %cst_8 {dimension_numbers = #tpu.dot_dimension_numbers<[1], [0], [0], [1], [0, 0, 1, 1], [], []>} : vector<8x256xf32>, vector<256x128xf32>, vector<8x128xf32> -> vector<8x128xf32>
    %c0_9 = arith.constant 0 : index
    %c0_10 = arith.constant 0 : index
    %11 = vector.load %arg7[%c0_9, %c0_10] : memref<1x128xf32, #tpu.memory_space<vmem>>, vector<1x128xf32>
    %12 = vector.broadcast %11 : vector<1x128xf32> to vector<8x128xf32>
    %13 = arith.mulf %10, %12 : vector<8x128xf32>
    %14 = arith.addf %5, %13 : vector<8x128xf32>
    %c0_11 = arith.constant 0 : index
    %c0_12 = arith.constant 0 : index
    %15 = vector.load %arg10[%c0_11, %c0_12] : memref<8x128xf32, #tpu.memory_space<vmem>>, vector<8x128xf32>
    %16 = arith.addf %15, %14 : vector<8x128xf32>
    %c0_13 = arith.constant 0 : index
    %c0_14 = arith.constant 0 : index
    %17 = vector.load %arg10[%c0_13, %c0_14] : memref<8x128xf32, #tpu.memory_space<vmem>>, vector<8x128xf32>
    tpu.vector_store %arg10[%c0_13, %c0_14], %16 {strides = array<i32>} : memref<8x128xf32, #tpu.memory_space<vmem>>, vector<8x128xf32>,
    %c1_i32 = arith.constant 1 : i32
    %18 = arith.cmpi eq, %arg2, %c1_i32 : i32
    %19 = arith.extui %18 : i1 to i32
    %c0_i32_15 = arith.constant 0 : i32
    %20 = arith.cmpi ne, %19, %c0_i32_15 : i32
    scf.if %20 {
      %c0_16 = arith.constant 0 : index
      %c0_17 = arith.constant 0 : index
      %21 = vector.load %arg10[%c0_16, %c0_17] : memref<8x128xf32, #tpu.memory_space<vmem>>, vector<8x128xf32>
      %c0_18 = arith.constant 0 : index
      %c0_19 = arith.constant 0 : index
      %22 = vector.load %arg8[%c0_18, %c0_19] : memref<1x128xf32, #tpu.memory_space<vmem>>, vector<1x128xf32>
      %23 = vector.broadcast %22 : vector<1x128xf32> to vector<8x128xf32>
      %24 = arith.addf %21, %23 : vector<8x128xf32>
      %c0_20 = arith.constant 0 : index
      %c0_21 = arith.constant 0 : index
      %25 = vector.load %arg9[%c0_20, %c0_21] : memref<8x128xf32, #tpu.memory_space<vmem>>, vector<8x128xf32>
      tpu.vector_store %arg9[%c0_20, %c0_21], %24 {strides = array<i32>} : memref<8x128xf32, #tpu.memory_space<vmem>>, vector<8x128xf32>,
    } else {
    }
    return
  }
  func.func @transform_0(%arg0: i32, %arg1: i32, %arg2: i32) -> (i32, i32) {
    %c0_i32 = arith.constant 0 : i32
    return %arg0, %arg2 : i32, i32
  }
  func.func @transform_1(%arg0: i32, %arg1: i32, %arg2: i32) -> (i32, i32) {
    %c0_i32 = arith.constant 0 : i32
    return %arg2, %arg1 : i32, i32
  }
  func.func @transform_2(%arg0: i32, %arg1: i32, %arg2: i32) -> (i32, i32) {
    %c0_i32 = arith.constant 0 : i32
    return %arg2, %arg1 : i32, i32
  }
  func.func @transform_3(%arg0: i32, %arg1: i32, %arg2: i32) -> (i32, i32) {
    %c0_i32 = arith.constant 0 : i32
    %c0_i32_0 = arith.constant 0 : i32
    return %c0_i32, %arg2 : i32, i32
  }
  func.func @transform_4(%arg0: i32, %arg1: i32, %arg2: i32) -> (i32, i32) {
    %c0_i32 = arith.constant 0 : i32
    %c0_i32_0 = arith.constant 0 : i32
    return %c0_i32, %arg1 : i32, i32
  }
  func.func @transform_5(%arg0: i32, %arg1: i32, %arg2: i32) -> (i32, i32) {
    %c0_i32 = arith.constant 0 : i32
    %c0_i32_0 = arith.constant 0 : i32
    return %c0_i32, %arg1 : i32, i32
  }
  func.func @transform_6(%arg0: i32, %arg1: i32, %arg2: i32) -> (i32, i32) {
    %c0_i32 = arith.constant 0 : i32
    return %arg0, %arg1 : i32, i32
  }
}

</mosaic_0001>

<llo_original>
// kernel: tpu_custom_call.1
$region0: #{tpu_custom_call.1}
  #allocation0 [shape = 'u32[]', space=smem, size = 0x4, offset = 0x4, fixed_abs, tag = 'smem constant byte address 0x4 - core index']
  #allocation1 [shape = 'u32[72,128]{1,0:T(1,128)}', space=vmem, size = 0x9000, scoped, tag = 'internal scratch']
  #allocation2 [shape = 'f32[8,128]{1,0:T(8,128)}', space=vmem, size = 0x1000, scoped, tag = 'scratch operand']
  %s0 = inlined_call_operand.hbm [shape: f32[8,512], index: 0, kind: input, shape index: {}]
  %s1 = inlined_call_operand.hbm [shape: f32[512,384], index: 1, kind: input, shape index: {}]
  %s2 = inlined_call_operand.hbm [shape: f32[512,384], index: 2, kind: input, shape index: {}]
  %s3 = inlined_call_operand.hbm [shape: f32[1,512], index: 3, kind: input, shape index: {}]
  %s4 = inlined_call_operand.vmem [shape: f32[1,384], index: 4, kind: input, shape index: {}]
  %s5 = inlined_call_operand.hbm [shape: f32[1,384], index: 5, kind: input, shape index: {}]
  %s6 = inlined_call_operand.hbm [shape: f32[8,384], index: 6, kind: output, shape index: {}]
  %s7 = sld [smem:[#allocation0]]
  $region85: #{tpu_custom_call.1} parent=0
    _
  %s9 = ssub.s32 1, %s7
  %s10 = scalar_select 0, %s9, %s7
  $region1: #{tpu_custom_call.1} parent=0
    #allocation3 [shape = 'u8[16384]{0}', space=vmem, size = 0x4000, scoped, tag = 'input window, operand 0']
    #allocation4 [shape = 's32[2]{0}', space=sflag, size = 0x8, scoped, tag = 'scoped memory for tpu_custom_call.1']
    #allocation5 [shape = 's32[2]{0}', space=sflag, size = 0x8, scoped, tag = 'scoped memory for tpu_custom_call.1']
    #allocation6 [shape = 'u8[262144]{0}', space=vmem, size = 0x40000, scoped, tag = 'input window, operand 1']
    #allocation7 [shape = 's32[2]{0}', space=sflag, size = 0x8, scoped, tag = 'scoped memory for tpu_custom_call.1']
    #allocation8 [shape = 'u8[262144]{0}', space=vmem, size = 0x40000, scoped, tag = 'input window, operand 2']
    #allocation9 [shape = 'u8[2048]{0}', space=vmem, size = 0x800, scoped, tag = 'input window, operand 3']
    #allocation10 [shape = 's32[2]{0}', space=sflag, size = 0x8, scoped, tag = 'scoped memory for tpu_custom_call.1']
    #allocation11 [shape = 'u8[1024]{0}', space=vmem, size = 0x400, scoped, tag = 'input window, operand 5']
    #allocation12 [shape = 'u8[8192]{0}', space=vmem, size = 0x2000, scoped, tag = 'output window, operand 0']
    %11 = vsyncpa [#allocation4], 0
    %s12 = scalar_lea.sflag [#allocation4], 1
    %13 = vsyncpa %s12, 0
    %14 = vsyncpa [#allocation7], 0
    %s15 = scalar_lea.sflag [#allocation7], 1
    %16 = vsyncpa %s15, 0
    %17 = vsyncpa [#allocation10], 0
    %s18 = scalar_lea.sflag [#allocation10], 1
    %19 = vsyncpa %s18, 0
    %20 = vsyncpa [#allocation5], 0
    %s21 = scalar_lea.sflag [#allocation5], 1
    %22 = vsyncpa %s21, 0
    loop: start=0, step=1, limit=8
    $region2: #{tpu_custom_call.1} parent=1 // loop_pre_header
      _
    $region3: #{tpu_custom_call.1} parent=1 // loop_header
      %s24 = sphi 0, %s28
      %p25 = scmp.ge.s32.totalorder %s24, 8
      %s31 = sphi 0, %s50
      %s32 = sphi 0, %s46
      %s33 = sphi 0, %s42
      %s34 = sphi 0, %s31
      %s35 = sphi 0, %s32
      %s36 = sphi 0, %s33
      %s37 = sphi 0, %s34
      %s38 = sphi 0, %s35
      %s39 = sphi 0, %s36
      %s55 = sphi 0, %s57
      %s58 = sphi 0, %s55
      %s59 = sphi 0, %s58
      %s75 = sphi 0, %s59
      %s83 = sphi 0, %s85
      %s86 = sphi 0, %s83
      %s87 = sphi 0, %s86
      %s103 = sphi 0, %s87
      %s111 = sphi 0, %s113
      %s114 = sphi 0, %s111
      %s115 = sphi 0, %s114
      %s131 = sphi 0, %s115
      %s137 = sphi 0, %s139
      %s140 = sphi 0, %s137
      %s141 = sphi 0, %s140
      %s157 = sphi 0, %s141
      %s163 = sphi 0, %s165
      %s166 = sphi 0, %s163
      %s167 = sphi 0, %s166
      %s183 = sphi 0, %s167
      %s189 = sphi 0, %s191
      %s192 = sphi 0, %s189
      %s193 = sphi 0, %s192
      %s209 = sphi 0, %s193
      %s217 = sphi 0, %s219
      %s220 = sphi 0, %s217
      %s221 = sphi 0, %s220
      %s237 = sphi 0, %s221
    $region4: #{tpu_custom_call.1} parent=1 // loop_header_branch
      %27 = sbr.rel (%p25) target = $region8
    $region5: #{tpu_custom_call.1} parent=1 // loop_body
      %s29 = ssub.s32 %s24, 1
      %s30 = ssub.s32 %s24, 2
      %s40 = sadd.s32 1, %s33
      %p41 = scmp.ge.s32.totalorder %s40, 2
      %s42 = scalar_select %p41, 0, %s40
      %s43 = sadd.s32 1, %s32
      %s44 = scalar_select %p41, %s43, %s32
      %p45 = scmp.ge.s32.totalorder %s44, 3
      %s46 = scalar_select %p45, 0, %s44
      %s47 = sadd.s32 1, %s31
      %s48 = scalar_select %p45, %s47, %s31
      %p49 = scmp.ge.s32.totalorder %s48, 1
      %s50 = scalar_select %p49, 0, %s48
      %s51 = ssub.s32 %s31, %s50
      %s52 = ssub.s32 %s33, %s42
      %s53 = sor.u32 %s51, %s52
      %p54 = scmp.eq.s32.totalorder %s53, 0
      %s56 = sadd.s32 %s55, 1
      %s57 = scalar_select %p54, %s55, %s56
      %p60 = pneg %p54
      %p61 = scmp.eq.s32.totalorder %s24, 5
      %p62 = por %p60, %p61
      %p63 = scmp.ne.s32.totalorder %s55, %s58
      %p64 = scmp.eq.s32.totalorder %s24, 0
      %p65 = por %p63, %p64
      %p66 = scmp.ne.s32.totalorder %s55, %s58
      %p67 = scmp.eq.s32.totalorder %s29, 5
      %p68 = por %p66, %p67
      %p69 = scmp.ne.s32.totalorder %s58, %s59
      %p70 = scmp.eq.s32.totalorder %s29, 0
      %p71 = por %p69, %p70
      %p72 = scmp.ne.s32.totalorder %s58, %s59
      %p73 = scmp.eq.s32.totalorder %s30, 5
      %p74 = por %p72, %p73
      %p76 = scmp.ne.s32.totalorder %s59, %s75
      %p77 = scmp.eq.s32.totalorder %s30, 0
      %p78 = por %p76, %p77
      %s79 = ssub.s32 %s33, %s42
      %s80 = ssub.s32 %s32, %s46
      %s81 = sor.u32 %s79, %s80
      %p82 = scmp.eq.s32.totalorder %s81, 0
      %s84 = sadd.s32 %s83, 1
      %s85 = scalar_select %p82, %s83, %s84
      %p88 = pneg %p82
      %p89 = scmp.eq.s32.totalorder %s24, 5
      %p90 = por %p88, %p89
      %p91 = scmp.ne.s32.totalorder %s83, %s86
      %p92 = scmp.eq.s32.totalorder %s24, 0
      %p93 = por %p91, %p92
      %p94 = scmp.ne.s32.totalorder %s83, %s86
      %p95 = scmp.eq.s32.totalorder %s29, 5
      %p96 = por %p94, %p95
      %p97 = scmp.ne.s32.totalorder %s86, %s87
      %p98 = scmp.eq.s32.totalorder %s29, 0
      %p99 = por %p97, %p98
      %p100 = scmp.ne.s32.totalorder %s86, %s87
      %p101 = scmp.eq.s32.totalorder %s30, 5
      %p102 = por %p100, %p101
      %p104 = scmp.ne.s32.totalorder %s87, %s103
      %p105 = scmp.eq.s32.totalorder %s30, 0
      %p106 = por %p104, %p105
      %s107 = ssub.s32 %s33, %s42
      %s108 = ssub.s32 %s32, %s46
      %s109 = sor.u32 %s107, %s108
      %p110 = scmp.eq.s32.totalorder %s109, 0
      %s112 = sadd.s32 %s111, 1
      %s113 = scalar_select %p110, %s111, %s112
      %p116 = pneg %p110
      %p117 = scmp.eq.s32.totalorder %s24, 5
      %p118 = por %p116, %p117
      %p119 = scmp.ne.s32.totalorder %s111, %s114
      %p120 = scmp.eq.s32.totalorder %s24, 0
      %p121 = por %p119, %p120
      %p122 = scmp.ne.s32.totalorder %s111, %s114
      %p123 = scmp.eq.s32.totalorder %s29, 5
      %p124 = por %p122, %p123
      %p125 = scmp.ne.s32.totalorder %s114, %s115
      %p126 = scmp.eq.s32.totalorder %s29, 0
      %p127 = por %p125, %p126
      %p128 = scmp.ne.s32.totalorder %s114, %s115
      %p129 = scmp.eq.s32.totalorder %s30, 5
      %p130 = por %p128, %p129
      %p132 = scmp.ne.s32.totalorder %s115, %s131
      %p133 = scmp.eq.s32.totalorder %s30, 0
      %p134 = por %p132, %p133
      %s135 = ssub.s32 %s33, %s42
      %p136 = scmp.eq.s32.totalorder %s135, 0
      %s138 = sadd.s32 %s137, 1
      %s139 = scalar_select %p136, %s137, %s138
      %p142 = pneg %p136
      %p143 = scmp.eq.s32.totalorder %s24, 5
      %p144 = por %p142, %p143
      %p145 = scmp.ne.s32.totalorder %s137, %s140
      %p146 = scmp.eq.s32.totalorder %s24, 0
      %p147 = por %p145, %p146
      %p148 = scmp.ne.s32.totalorder %s137, %s140
      %p149 = scmp.eq.s32.totalorder %s29, 5
      %p150 = por %p148, %p149
      %p151 = scmp.ne.s32.totalorder %s140, %s141
      %p152 = scmp.eq.s32.totalorder %s29, 0
      %p153 = por %p151, %p152
      %p154 = scmp.ne.s32.totalorder %s140, %s141
      %p155 = scmp.eq.s32.totalorder %s30, 5
      %p156 = por %p154, %p155
      %p158 = scmp.ne.s32.totalorder %s141, %s157
      %p159 = scmp.eq.s32.totalorder %s30, 0
      %p160 = por %p158, %p159
      %s161 = ssub.s32 %s32, %s46
      %p162 = scmp.eq.s32.totalorder %s161, 0
      %s164 = sadd.s32 %s163, 1
      %s165 = scalar_select %p162, %s163, %s164
      %p168 = pneg %p162
      %p169 = scmp.eq.s32.totalorder %s24, 5
      %p170 = por %p168, %p169
      %p171 = scmp.ne.s32.totalorder %s163, %s166
      %p172 = scmp.eq.s32.totalorder %s24, 0
      %p173 = por %p171, %p172
      %p174 = scmp.ne.s32.totalorder %s163, %s166
      %p175 = scmp.eq.s32.totalorder %s29, 5
      %p176 = por %p174, %p175
      %p177 = scmp.ne.s32.totalorder %s166, %s167
      %p178 = scmp.eq.s32.totalorder %s29, 0
      %p179 = por %p177, %p178
      %p180 = scmp.ne.s32.totalorder %s166, %s167
      %p181 = scmp.eq.s32.totalorder %s30, 5
      %p182 = por %p180, %p181
      %p184 = scmp.ne.s32.totalorder %s167, %s183
      %p185 = scmp.eq.s32.totalorder %s30, 0
      %p186 = por %p184, %p185
      %s187 = ssub.s32 %s32, %s46
      %p188 = scmp.eq.s32.totalorder %s187, 0
      %s190 = sadd.s32 %s189, 1
      %s191 = scalar_select %p188, %s189, %s190
      %p194 = pneg %p188
      %p195 = scmp.eq.s32.totalorder %s24, 5
      %p196 = por %p194, %p195
      %p197 = scmp.ne.s32.totalorder %s189, %s192
      %p198 = scmp.eq.s32.totalorder %s24, 0
      %p199 = por %p197, %p198
      %p200 = scmp.ne.s32.totalorder %s189, %s192
      %p201 = scmp.eq.s32.totalorder %s29, 5
      %p202 = por %p200, %p201
      %p203 = scmp.ne.s32.totalorder %s192, %s193
      %p204 = scmp.eq.s32.totalorder %s29, 0
      %p205 = por %p203, %p204
      %p206 = scmp.ne.s32.totalorder %s192, %s193
      %p207 = scmp.eq.s32.totalorder %s30, 5
      %p208 = por %p206, %p207
      %p210 = scmp.ne.s32.totalorder %s193, %s209
      %p211 = scmp.eq.s32.totalorder %s30, 0
      %p212 = por %p210, %p211
      %s213 = ssub.s32 %s31, %s50
      %s214 = ssub.s32 %s32, %s46
      %s215 = sor.u32 %s213, %s214
      %p216 = scmp.eq.s32.totalorder %s215, 0
      %s218 = sadd.s32 %s217, 1
      %s219 = scalar_select %p216, %s217, %s218
      %p222 = pneg %p216
      %p223 = scmp.eq.s32.totalorder %s24, 5
      %p224 = por %p222, %p223
      %p225 = scmp.ne.s32.totalorder %s217, %s220
      %p226 = scmp.eq.s32.totalorder %s24, 0
      %p227 = por %p225, %p226
      %p228 = scmp.ne.s32.totalorder %s217, %s220
      %p229 = scmp.eq.s32.totalorder %s29, 5
      %p230 = por %p228, %p229
      %p231 = scmp.ne.s32.totalorder %s220, %s221
      %p232 = scmp.eq.s32.totalorder %s29, 0
      %p233 = por %p231, %p232
      %p234 = scmp.ne.s32.totalorder %s220, %s221
      %p235 = scmp.eq.s32.totalorder %s30, 5
      %p236 = por %p234, %p235
      %p238 = scmp.ne.s32.totalorder %s221, %s237
      %p239 = scmp.eq.s32.totalorder %s30, 0
      %p240 = por %p238, %p239
      %p241 = scmp.le.s32.totalorder 1, %s24
      %p242 = scmp.lt.s32.totalorder %s24, 7
      %p243 = pnand %p241, %p242
      %p244 = pneg %p243
      // Predicated region
      $region9: #{tpu_custom_call.1} parent=5 // pred_check
        _
      $region10: #{tpu_custom_call.1} parent=5 // pred_check_branch
        %246 = sbr.rel (%p243) target = $region12
      $region11: #{tpu_custom_call.1} parent=5 // pred_region
        %s247 = ssub.s32 %s24, 1
      $region12: #{tpu_custom_call.1} parent=5 // pred_fallthru
        _
      %p248 = scmp.lt.s32.totalorder %s24, 6
      // Predicated region
      $region13: #{tpu_custom_call.1} parent=5 // pred_check
        %p249 = pneg %p248
      $region14: #{tpu_custom_call.1} parent=5 // pred_check_branch
        %251 = sbr.rel (%p249) target = $region16
      $region15: #{tpu_custom_call.1} parent=5 // pred_region
        // Predicated region
        $region17: #{tpu_custom_call.1} parent=15 // pred_check
          %p252 = pneg %p65
        $region18: #{tpu_custom_call.1} parent=15 // pred_check_branch
          %254 = sbr.rel (%p252) target = $region20
        $region19: #{tpu_custom_call.1} parent=15 // pred_region
          %s255 = sand.u32 %s55, 1
          %s256 = scalar_lea.sflag [#allocation4], %s255
          %s257 = sand.u32 %s55, 1
          %s258 = smul.addr %s257, 16
          %s259 = scalar_lea.vmem [#allocation3], %s258
          %s260 = smul.u32 2, %s33
          %262 = vsyncadd %s256, 0
          %s263 = smul.addr %s31, 4
          %s264 = sadd.s32 %s260, %s263
          %s265 = smul.addr %s264, 8
          %s266 = scalar_lea.hbm %s0, %s265
          %s268 = sshll.u32 %s266, 4
          %s269 = int_to_ptr.hbm [resolvable:$true] %s268
          %s270 = sshll.u32 %s259, 4
          %s271 = int_to_ptr.vmem [resolvable:$true] %s270
          %273 = dma.hbm_to_vmem [thread:$0]  %s269, 256, %s271, %s256
        $region20: #{tpu_custom_call.1} parent=15 // pred_fallthru
          _
        // Predicated region
        $region21: #{tpu_custom_call.1} parent=15 // pred_check
          %p274 = pneg %p93
        $region22: #{tpu_custom_call.1} parent=15 // pred_check_branch
          %276 = sbr.rel (%p274) target = $region24
        $region23: #{tpu_custom_call.1} parent=15 // pred_region
          %s277 = sand.u32 %s24, 1
          %s278 = scalar_lea.sflag [#allocation7], %s277
          %s279 = sand.u32 %s83, 1
          %s280 = smul.addr %s279, 256
          %s281 = scalar_lea.vmem [#allocation6], %s280
          %s282 = smul.u32 32, %s33
          %284 = vsyncadd %s278, 0
          %s285 = smul.addr %s282, 3
          %s286 = sadd.s32 %s32, %s285
          %s287 = smul.addr %s286, 8
          %s288 = scalar_lea.hbm %s1, %s287
          %s289 = sshll.u32 %s288, 4
          %s290 = int_to_ptr.hbm [resolvable:$true] %s289
          %s291 = sshll.u32 %s281, 4
          %s292 = int_to_ptr.vmem [resolvable:$true] %s291
          %297 = dma.hbm_to_vmem [thread:$0]  %s290, 4096, %s292, %s278, 384, 128, 8
        $region24: #{tpu_custom_call.1} parent=15 // pred_fallthru
          _
        // Predicated region
        $region25: #{tpu_custom_call.1} parent=15 // pred_check
          %p298 = pneg %p121
        $region26: #{tpu_custom_call.1} parent=15 // pred_check_branch
          %300 = sbr.rel (%p298) target = $region28
        $region27: #{tpu_custom_call.1} parent=15 // pred_region
          %s301 = sand.u32 %s24, 1
          %s302 = scalar_lea.sflag [#allocation7], %s301
          %s303 = sand.u32 %s111, 1
          %s304 = smul.addr %s303, 256
          %s305 = scalar_lea.vmem [#allocation8], %s304
          %s306 = smul.u32 32, %s33
          %308 = vsyncadd %s302, 0
          %s309 = smul.addr %s306, 3
          %s310 = sadd.s32 %s32, %s309
          %s311 = smul.addr %s310, 8
          %s312 = scalar_lea.hbm %s2, %s311
          %s313 = sshll.u32 %s312, 4
          %s314 = int_to_ptr.hbm [resolvable:$true] %s313
          %s315 = sshll.u32 %s305, 4
          %s316 = int_to_ptr.vmem [resolvable:$true] %s315
          %321 = dma.hbm_to_vmem [thread:$0]  %s314, 4096, %s316, %s302, 384, 128, 8
        $region28: #{tpu_custom_call.1} parent=15 // pred_fallthru
          _
        // Predicated region
        $region29: #{tpu_custom_call.1} parent=15 // pred_check
          %p322 = pneg %p147
        $region30: #{tpu_custom_call.1} parent=15 // pred_check_branch
          %324 = sbr.rel (%p322) target = $region32
        $region31: #{tpu_custom_call.1} parent=15 // pred_region
          %s325 = sand.u32 %s24, 1
          %s326 = scalar_lea.sflag [#allocation10], %s325
          %s327 = sand.u32 %s137, 1
          %s328 = smul.addr %s327, 2
          %s329 = scalar_lea.vmem [#allocation9], %s328
          %s330 = smul.u32 2, %s33
          %332 = vsyncadd %s326, 0
          %s333 = scalar_lea.hbm %s3, %s330
          %s335 = sshll.u32 %s333, 4
          %s336 = int_to_ptr.hbm [resolvable:$true] %s335
          %s337 = sshll.u32 %s329, 4
          %s338 = int_to_ptr.vmem [resolvable:$true] %s337
          %340 = dma.hbm_to_vmem [thread:$0]  %s336, 32, %s338, %s326
        $region32: #{tpu_custom_call.1} parent=15 // pred_fallthru
          _
        // Predicated region
        $region33: #{tpu_custom_call.1} parent=15 // pred_check
          %p341 = pneg %p173
        $region34: #{tpu_custom_call.1} parent=15 // pred_check_branch
          %343 = sbr.rel (%p341) target = $region36
        $region35: #{tpu_custom_call.1} parent=15 // pred_region
          %p344 = scmp.lt.s32.totalorder %s32, 2
          %s345 = scalar_select %p344, %s32, 2
          %s346 = scalar_lea.vmem %s4, %s345
        $region36: #{tpu_custom_call.1} parent=15 // pred_fallthru
          _
        // Predicated region
        $region37: #{tpu_custom_call.1} parent=15 // pred_check
          %p347 = pneg %p199
        $region38: #{tpu_custom_call.1} parent=15 // pred_check_branch
          %349 = sbr.rel (%p347) target = $region40
        $region39: #{tpu_custom_call.1} parent=15 // pred_region
          %s350 = sand.u32 %s24, 1
          %s351 = scalar_lea.sflag [#allocation10], %s350
          %s352 = sand.u32 %s189, 1
          %s353 = scalar_lea.vmem [#allocation11], %s352
          %355 = vsyncadd %s351, 0
          %s356 = scalar_lea.hbm %s5, %s32
          %s358 = sshll.u32 %s356, 4
          %s359 = int_to_ptr.hbm [resolvable:$true] %s358
          %s360 = sshll.u32 %s353, 4
          %s361 = int_to_ptr.vmem [resolvable:$true] %s360
          %363 = dma.hbm_to_vmem [thread:$0]  %s359, 16, %s361, %s351
        $region40: #{tpu_custom_call.1} parent=15 // pred_fallthru
          _
      $region16: #{tpu_custom_call.1} parent=5 // pred_fallthru
        _
      %p364 = scmp.le.s32.totalorder 1, %s24
      %p365 = scmp.lt.s32.totalorder %s24, 7
      %p366 = pnand %p364, %p365
      %p367 = pneg %p366
      // Predicated region
      $region41: #{tpu_custom_call.1} parent=5 // pred_check
        _
      $region42: #{tpu_custom_call.1} parent=5 // pred_check_branch
        %369 = sbr.rel (%p366) target = $region44
      $region43: #{tpu_custom_call.1} parent=5 // pred_region
        %s370 = ssub.s32 %s24, 1
        %s371 = sand.u32 %s58, 1
        %s372 = scalar_lea.sflag [#allocation4], %s371
        %s373 = sand.u32 %s58, 1
        %s374 = smul.addr %s373, 16
        %s375 = scalar_lea.vmem [#allocation3], %s374
        // Predicated region
        $region45: #{tpu_custom_call.1} parent=43 // pred_check
          %p376 = pneg %p71
        $region46: #{tpu_custom_call.1} parent=43 // pred_check_branch
          %378 = sbr.rel (%p376) target = $region48
        $region47: #{tpu_custom_call.1} parent=43 // pred_region
          %380 = dma.done %s372, 256
        $region48: #{tpu_custom_call.1} parent=43 // pred_fallthru
          _
        %s381 = sand.u32 %s29, 1
        %s382 = scalar_lea.sflag [#allocation7], %s381
        %s383 = sand.u32 %s86, 1
        %s384 = smul.addr %s383, 256
        %s385 = scalar_lea.vmem [#allocation6], %s384
        // Predicated region
        $region49: #{tpu_custom_call.1} parent=43 // pred_check
          %p386 = pneg %p99
        $region50: #{tpu_custom_call.1} parent=43 // pred_check_branch
          %388 = sbr.rel (%p386) target = $region52
        $region51: #{tpu_custom_call.1} parent=43 // pred_region
          %390 = dma.done %s382, 4096
        $region52: #{tpu_custom_call.1} parent=43 // pred_fallthru
          _
        %s391 = sand.u32 %s29, 1
        %s392 = scalar_lea.sflag [#allocation7], %s391
        %s393 = sand.u32 %s114, 1
        %s394 = smul.addr %s393, 256
        %s395 = scalar_lea.vmem [#allocation8], %s394
        // Predicated region
        $region53: #{tpu_custom_call.1} parent=43 // pred_check
          %p396 = pneg %p127
        $region54: #{tpu_custom_call.1} parent=43 // pred_check_branch
          %398 = sbr.rel (%p396) target = $region56
        $region55: #{tpu_custom_call.1} parent=43 // pred_region
          %400 = dma.done %s392, 4096
        $region56: #{tpu_custom_call.1} parent=43 // pred_fallthru
          _
        %s401 = sand.u32 %s29, 1
        %s402 = scalar_lea.sflag [#allocation10], %s401
        %s403 = sand.u32 %s140, 1
        %s404 = smul.addr %s403, 2
        %s405 = scalar_lea.vmem [#allocation9], %s404
        // Predicated region
        $region57: #{tpu_custom_call.1} parent=43 // pred_check
          %p406 = pneg %p153
        $region58: #{tpu_custom_call.1} parent=43 // pred_check_branch
          %408 = sbr.rel (%p406) target = $region60
        $region59: #{tpu_custom_call.1} parent=43 // pred_region
          %410 = dma.done %s402, 32
        $region60: #{tpu_custom_call.1} parent=43 // pred_fallthru
          _
        %s411 = sand.u32 %s29, 1
        %s412 = scalar_lea.sflag [#allocation10], %s411
        %s413 = sand.u32 %s192, 1
        %s414 = scalar_lea.vmem [#allocation11], %s413
        // Predicated region
        $region61: #{tpu_custom_call.1} parent=43 // pred_check
          %p415 = pneg %p205
        $region62: #{tpu_custom_call.1} parent=43 // pred_check_branch
          %417 = sbr.rel (%p415) target = $region64
        $region63: #{tpu_custom_call.1} parent=43 // pred_region
          %419 = dma.done %s412, 16
        $region64: #{tpu_custom_call.1} parent=43 // pred_fallthru
          _
        %s420 = sand.u32 %s58, 1
        %s421 = scalar_lea.sflag [#allocation4], %s420
        %s422 = sand.u32 %s58, 1
        %s423 = smul.addr %s422, 16
        %s424 = scalar_lea.vmem [#allocation3], %s423
        %p425 = pneg %p71
        %p426 = pneg %p68
        %s427 = sand.u32 %s29, 1
        %s428 = scalar_lea.sflag [#allocation7], %s427
        %s429 = sand.u32 %s86, 1
        %s430 = smul.addr %s429, 256
        %s431 = scalar_lea.vmem [#allocation6], %s430
        %p432 = pneg %p99
        %p433 = pneg %p96
        %s434 = sand.u32 %s29, 1
        %s435 = scalar_lea.sflag [#allocation7], %s434
        %s436 = sand.u32 %s114, 1
        %s437 = smul.addr %s436, 256
        %s438 = scalar_lea.vmem [#allocation8], %s437
        %p439 = pneg %p127
        %p440 = pneg %p124
        %s441 = sand.u32 %s29, 1
        %s442 = scalar_lea.sflag [#allocation10], %s441
        %s443 = sand.u32 %s140, 1
        %s444 = smul.addr %s443, 2
        %s445 = scalar_lea.vmem [#allocation9], %s444
        %p446 = pneg %p153
        %p447 = pneg %p150
        %p448 = scmp.lt.s32.totalorder %s35, 2
        %s449 = scalar_select %p448, %s35, 2
        %s450 = scalar_lea.vmem %s4, %s449
        %p451 = pneg %p179
        %p452 = pneg %p176
        %s453 = sand.u32 %s29, 1
        %s454 = scalar_lea.sflag [#allocation10], %s453
        %s455 = sand.u32 %s192, 1
        %s456 = scalar_lea.vmem [#allocation11], %s455
        %p457 = pneg %p205
        %p458 = pneg %p202
        %p459 = pneg %p233
        %p460 = pneg %p230
        %s461 = sand.u32 %s220, 1
        %s462 = scalar_lea.sflag [#allocation5], %s461
        %s463 = sand.u32 %s220, 1
        %s464 = smul.addr %s463, 8
        %s465 = scalar_lea.vmem [#allocation12], %s464
        %s466 = smul.u32 2, %s36
        %s467 = smul.u32 32, %s36
        %s468 = smul.u32 32, %s36
        %s469 = smul.u32 2, %s36
        %p470 = scmp.lt.s32.totalorder %s35, 2
        %s471 = scalar_select %p470, %s35, 2
        %s472 = scalar_lea.vmem %s4, %s471
        %p473 = scmp.eq.s32.totalorder %s36, 0
        // Predicated region
        $region65: #{tpu_custom_call.1} parent=43 // pred_check
          %p474 = pneg %p473
        $region66: #{tpu_custom_call.1} parent=43 // pred_check_branch
          %476 = sbr.rel (%p474) target = $region68
        $region67: #{tpu_custom_call.1} parent=43 // pred_region
          %477 = vst [vmem:[#allocation2] sm:$0xff] 0.0
        $region68: #{tpu_custom_call.1} parent=43 // pred_fallthru
          _
        %v478 = vld [vmem:[%s375] sm:$0xff]
        %v479 = vld [vmem:[%s375 + $0x8] sm:$0xff]
        %v480 = vld [vmem:[%s385] sm:$0xff]
        %v481 = vld [vmem:[%s385 + $0x8] sm:$0xff]
        %v482 = vld [vmem:[%s385 + $0x10] sm:$0xff]
        %v483 = vld [vmem:[%s385 + $0x18] sm:$0xff]
        %v484 = vld [vmem:[%s385 + $0x20] sm:$0xff]
        %v485 = vld [vmem:[%s385 + $0x28] sm:$0xff]
        %v486 = vld [vmem:[%s385 + $0x30] sm:$0xff]
        %v487 = vld [vmem:[%s385 + $0x38] sm:$0xff]
        %v488 = vld [vmem:[%s385 + $0x40] sm:$0xff]
        %v489 = vld [vmem:[%s385 + $0x48] sm:$0xff]
        %v490 = vld [vmem:[%s385 + $0x50] sm:$0xff]
        %v491 = vld [vmem:[%s385 + $0x58] sm:$0xff]
        %v492 = vld [vmem:[%s385 + $0x60] sm:$0xff]
        %v493 = vld [vmem:[%s385 + $0x68] sm:$0xff]
        %v494 = vld [vmem:[%s385 + $0x70] sm:$0xff]
        %v495 = vld [vmem:[%s385 + $0x78] sm:$0xff]
        %v496 = vld [vmem:[%s385 + $0x80] sm:$0xff]
        %v497 = vld [vmem:[%s385 + $0x88] sm:$0xff]
        %v498 = vld [vmem:[%s385 + $0x90] sm:$0xff]
        %v499 = vld [vmem:[%s385 + $0x98] sm:$0xff]
        %v500 = vld [vmem:[%s385 + $0xa0] sm:$0xff]
        %v501 = vld [vmem:[%s385 + $0xa8] sm:$0xff]
        %v502 = vld [vmem:[%s385 + $0xb0] sm:$0xff]
        %v503 = vld [vmem:[%s385 + $0xb8] sm:$0xff]
        %v504 = vld [vmem:[%s385 + $0xc0] sm:$0xff]
        %v505 = vld [vmem:[%s385 + $0xc8] sm:$0xff]
        %v506 = vld [vmem:[%s385 + $0xd0] sm:$0xff]
        %v507 = vld [vmem:[%s385 + $0xd8] sm:$0xff]
        %v508 = vld [vmem:[%s385 + $0xe0] sm:$0xff]
        %v509 = vld [vmem:[%s385 + $0xe8] sm:$0xff]
        %v510 = vld [vmem:[%s385 + $0xf0] sm:$0xff]
        %v511 = vld [vmem:[%s385 + $0xf8] sm:$0xff]
        %v512 = vld [vmem:[%s405] sm:$0x3]
        %v514 = vperm.slane %v512, 0
        %v515 = vperm.slane %v512, 1
        %v518 = vmul.f32 %v478, %v514
        %v519 = vmul.f32 %v479, %v515
        %v520 = vld [vmem:[%s395] sm:$0xff]
        %v521 = vld [vmem:[%s395 + $0x8] sm:$0xff]
        %v522 = vld [vmem:[%s395 + $0x10] sm:$0xff]
        %v523 = vld [vmem:[%s395 + $0x18] sm:$0xff]
        %v524 = vld [vmem:[%s395 + $0x20] sm:$0xff]
        %v525 = vld [vmem:[%s395 + $0x28] sm:$0xff]
        %v526 = vld [vmem:[%s395 + $0x30] sm:$0xff]
        %v527 = vld [vmem:[%s395 + $0x38] sm:$0xff]
        %v528 = vld [vmem:[%s395 + $0x40] sm:$0xff]
        %v529 = vld [vmem:[%s395 + $0x48] sm:$0xff]
        %v530 = vld [vmem:[%s395 + $0x50] sm:$0xff]
        %v531 = vld [vmem:[%s395 + $0x58] sm:$0xff]
        %v532 = vld [vmem:[%s395 + $0x60] sm:$0xff]
        %v533 = vld [vmem:[%s395 + $0x68] sm:$0xff]
        %v534 = vld [vmem:[%s395 + $0x70] sm:$0xff]
        %v535 = vld [vmem:[%s395 + $0x78] sm:$0xff]
        %v536 = vld [vmem:[%s395 + $0x80] sm:$0xff]
        %v537 = vld [vmem:[%s395 + $0x88] sm:$0xff]
        %v538 = vld [vmem:[%s395 + $0x90] sm:$0xff]
        %v539 = vld [vmem:[%s395 + $0x98] sm:$0xff]
        %v540 = vld [vmem:[%s395 + $0xa0] sm:$0xff]
        %v541 = vld [vmem:[%s395 + $0xa8] sm:$0xff]
        %v542 = vld [vmem:[%s395 + $0xb0] sm:$0xff]
        %v543 = vld [vmem:[%s395 + $0xb8] sm:$0xff]
        %v544 = vld [vmem:[%s395 + $0xc0] sm:$0xff]
        %v545 = vld [vmem:[%s395 + $0xc8] sm:$0xff]
        %v546 = vld [vmem:[%s395 + $0xd0] sm:$0xff]
        %v547 = vld [vmem:[%s395 + $0xd8] sm:$0xff]
        %v548 = vld [vmem:[%s395 + $0xe0] sm:$0xff]
        %v549 = vld [vmem:[%s395 + $0xe8] sm:$0xff]
        %v550 = vld [vmem:[%s395 + $0xf0] sm:$0xff]
        %v551 = vld [vmem:[%s395 + $0xf8] sm:$0xff]
        %552 = vmatpush.msra.mxu0 %v535
        %553 = vmatpush.msra.mxu0 %v534
        %554 = vmatpush.msra.mxu0 %v533
        %555 = vmatpush.msra.mxu0 %v532
        %556 = vmatpush.msra.mxu0 %v531
        %557 = vmatpush.msra.mxu0 %v530
        %558 = vmatpush.msra.mxu0 %v529
        %559 = vmatpush.msra.mxu0 %v528
        %560 = vmatpush.msra.mxu0 %v527
        %561 = vmatpush.msra.mxu0 %v526
        %562 = vmatpush.msra.mxu0 %v525
        %563 = vmatpush.msra.mxu0 %v524
        %564 = vmatpush.msra.mxu0 %v523
        %565 = vmatpush.msra.mxu0 %v522
        %566 = vmatpush.msra.mxu0 %v521
        %567 = vmatpush.msra.mxu0 %v520
        %568 = vmatmul.f32.gmra.mxu0 %v518
        %v569 = vpop.f32.mrf.mxu0
        %v570 = vadd.f32 0.0, %v569
        %571 = vdwg.mxu0
        %572 = vmatpush.msra.mxu0 %v551
        %573 = vmatpush.msra.mxu0 %v550
        %574 = vmatpush.msra.mxu0 %v549
        %575 = vmatpush.msra.mxu0 %v548
        %576 = vmatpush.msra.mxu0 %v547
        %577 = vmatpush.msra.mxu0 %v546
        %578 = vmatpush.msra.mxu0 %v545
        %579 = vmatpush.msra.mxu0 %v544
        %580 = vmatpush.msra.mxu0 %v543
        %581 = vmatpush.msra.mxu0 %v542
        %582 = vmatpush.msra.mxu0 %v541
        %583 = vmatpush.msra.mxu0 %v540
        %584 = vmatpush.msra.mxu0 %v539
        %585 = vmatpush.msra.mxu0 %v538
        %586 = vmatpush.msra.mxu0 %v537
        %587 = vmatpush.msra.mxu0 %v536
        %588 = vmatmul.f32.gmra.mxu0 %v519
        %v589 = vpop.f32.mrf.mxu0
        %v590 = vadd.f32 %v570, %v589
        %591 = vdwg.mxu0
        %v592 = vld [vmem:[%s472] sm:$0x1]
        %v594 = vperm.slane %v592, 0
        %v596 = vmul.f32 %v590, %v594
        %597 = vmatpush.msra.mxu0 %v495
        %598 = vmatpush.msra.mxu0 %v494
        %599 = vmatpush.msra.mxu0 %v493
        %600 = vmatpush.msra.mxu0 %v492
        %601 = vmatpush.msra.mxu0 %v491
        %602 = vmatpush.msra.mxu0 %v490
        %603 = vmatpush.msra.mxu0 %v489
        %604 = vmatpush.msra.mxu0 %v488
        %605 = vmatpush.msra.mxu0 %v487
        %606 = vmatpush.msra.mxu0 %v486
        %607 = vmatpush.msra.mxu0 %v485
        %608 = vmatpush.msra.mxu0 %v484
        %609 = vmatpush.msra.mxu0 %v483
        %610 = vmatpush.msra.mxu0 %v482
        %611 = vmatpush.msra.mxu0 %v481
        %612 = vmatpush.msra.mxu0 %v480
        %613 = vmatmul.f32.gmra.mxu0 %v478
        %v614 = vpop.f32.mrf.mxu0
        %v615 = vadd.f32 %v596, %v614
        %616 = vdwg.mxu0
        %617 = vmatpush.msra.mxu0 %v511
        %618 = vmatpush.msra.mxu0 %v510
        %619 = vmatpush.msra.mxu0 %v509
        %620 = vmatpush.msra.mxu0 %v508
        %621 = vmatpush.msra.mxu0 %v507
        %622 = vmatpush.msra.mxu0 %v506
        %623 = vmatpush.msra.mxu0 %v505
        %624 = vmatpush.msra.mxu0 %v504
        %625 = vmatpush.msra.mxu0 %v503
        %626 = vmatpush.msra.mxu0 %v502
        %627 = vmatpush.msra.mxu0 %v501
        %628 = vmatpush.msra.mxu0 %v500
        %629 = vmatpush.msra.mxu0 %v499
        %630 = vmatpush.msra.mxu0 %v498
        %631 = vmatpush.msra.mxu0 %v497
        %632 = vmatpush.msra.mxu0 %v496
        %633 = vmatmul.f32.gmra.mxu0 %v479
        %v634 = vpop.f32.mrf.mxu0
        %v635 = vadd.f32 %v615, %v634
        %636 = vdwg.mxu0
        %v637 = vld [vmem:[#allocation2] sm:$0xff]
        %v638 = vadd.f32 %v637, %v635
        %639 = vst [vmem:[#allocation2] sm:$0xff] %v638
        %p640 = scmp.eq.s32.totalorder %s36, 1
        // Predicated region
        $region69: #{tpu_custom_call.1} parent=43 // pred_check
          %p641 = pneg %p640
        $region70: #{tpu_custom_call.1} parent=43 // pred_check_branch
          %643 = sbr.rel (%p641) target = $region72
        $region71: #{tpu_custom_call.1} parent=43 // pred_region
          %v644 = vld [vmem:[#allocation2] sm:$0xff]
          %v645 = vld [vmem:[%s414] sm:$0x1]
          %v647 = vperm.slane %v645, 0
          %v649 = vadd.f32 %v644, %v647
          %650 = vst [vmem:[%s465] sm:$0xff] %v649
        $region72: #{tpu_custom_call.1} parent=43 // pred_fallthru
          _
        %s651 = sand.u32 %s220, 1
        %s652 = scalar_lea.sflag [#allocation5], %s651
        %s653 = sand.u32 %s220, 1
        %s654 = smul.addr %s653, 8
        %s655 = scalar_lea.vmem [#allocation12], %s654
        // Predicated region
        $region73: #{tpu_custom_call.1} parent=43 // pred_check
          %p656 = pneg %p230
        $region74: #{tpu_custom_call.1} parent=43 // pred_check_branch
          %658 = sbr.rel (%p656) target = $region76
        $region75: #{tpu_custom_call.1} parent=43 // pred_region
          %660 = vsyncadd %s652, 0
          %s661 = smul.addr %s34, 3
          %s662 = sadd.s32 %s35, %s661
          %s663 = smul.addr %s662, 8
          %s664 = scalar_lea.hbm %s6, %s663
          %s666 = sshll.u32 %s655, 4
          %s667 = int_to_ptr.vmem [resolvable:$true] %s666
          %s668 = sshll.u32 %s664, 4
          %s669 = int_to_ptr.hbm [resolvable:$true] %s668
          %671 = dma.vmem_to_hbm [thread:$0]  %s667, 128, %s669, %s652
        $region76: #{tpu_custom_call.1} parent=43 // pred_fallthru
          _
      $region44: #{tpu_custom_call.1} parent=5 // pred_fallthru
        _
      %p672 = scmp.le.s32.totalorder 2, %s24
      // Predicated region
      $region77: #{tpu_custom_call.1} parent=5 // pred_check
        %p673 = pneg %p672
      $region78: #{tpu_custom_call.1} parent=5 // pred_check_branch
        %675 = sbr.rel (%p673) target = $region80
      $region79: #{tpu_custom_call.1} parent=5 // pred_region
        %s676 = ssub.s32 %s24, 2
        // Predicated region
        $region81: #{tpu_custom_call.1} parent=79 // pred_check
          %p677 = pneg %p236
        $region82: #{tpu_custom_call.1} parent=79 // pred_check_branch
          %679 = sbr.rel (%p677) target = $region84
        $region83: #{tpu_custom_call.1} parent=79 // pred_region
          %s680 = sand.u32 %s221, 1
          %s681 = scalar_lea.sflag [#allocation5], %s680
          %s682 = sand.u32 %s221, 1
          %s683 = smul.addr %s682, 8
          %s684 = scalar_lea.vmem [#allocation12], %s683
          %686 = dma.done %s681, 128
        $region84: #{tpu_custom_call.1} parent=79 // pred_fallthru
          _
      $region80: #{tpu_custom_call.1} parent=5 // pred_fallthru
        _
    $region6: #{tpu_custom_call.1} parent=1 // loop_footer
      %s28 = sadd.s32 1, %s24
    $region7: #{tpu_custom_call.1} parent=1 // loop_footer_branch
      %23 = sbr.rel target = $region3
    $region8: #{tpu_custom_call.1} parent=1 // loop_exit
      _
    %687 = vsyncpa [#allocation4], 1
    %s688 = scalar_lea.sflag [#allocation4], 1
    %689 = vsyncpa %s688, 1
    %690 = vsyncpa [#allocation7], 1
    %s691 = scalar_lea.sflag [#allocation7], 1
    %692 = vsyncpa %s691, 1
    %693 = vsyncpa [#allocation10], 1
    %s694 = scalar_lea.sflag [#allocation10], 1
    %695 = vsyncpa %s694, 1
    %696 = vsyncpa [#allocation5], 1
    %s697 = scalar_lea.sflag [#allocation5], 1
    %698 = vsyncpa %s697, 1

</llo_original>
